<compile_context>
chip_gen: v6e
topology: v6e:2x2x1
jax: 0.10.0
libtpu: 0.0.40
codegen_flags: <defaults>
</compile_context>

<pallas_src>
import jax
import jax.numpy as jnp
from jax.experimental import pallas as pl
from jax.experimental.pallas import tpu as pltpu

OUT_PAD = 128       # fused output slab width (action_dim + 1, padded to a lane tile)
BLOCK_B_MAX = 1024  # max rows per batch tile (working set << scoped VMEM everywhere)
MIN_SPLIT_B = 512   # above this padded batch, force >=2 tiles (v7x megacore sharding)


def _round_up(x, m):
    return ((x + m - 1) // m) * m


def _cdiv(a, b):
    return (a + b - 1) // b


def _fused_actor_critic_kernel(x_ref, w1_ref, b1_ref, w2_ref, b2_ref, o_ref):
    """Both heads at once: out = relu(x @ W1f + b1f) @ W2f + b2f.

    W1f/W2f are the block-diagonal fused (zero-padded) parameters, so one pair
    of MXU matmuls computes actor logits and critic value together; the store
    is one unmasked, lane-dense (block_b, 128) f32 tile.
    """
    x = x_ref[...]                                        # (block_b, D)
    h = jnp.dot(x, w1_ref[...],
                preferred_element_type=jnp.float32)       # (block_b, H_fused) MXU
    h = jnp.maximum(h + b1_ref[...], 0.0)                 # f32 bias + ReLU (VPU)
    h = h.astype(w2_ref.dtype)                            # bf16 recast iff bf16 path
    o = jnp.dot(h, w2_ref[...],
                preferred_element_type=jnp.float32)       # (block_b, OUT_PAD) MXU
    o_ref[...] = (o + b2_ref[...]).astype(o_ref.dtype)


def init_mlp_params(key, in_dim, hidden_dim, out_dim):
    """Deterministic synthetic init (PyTorch-Linear-like uniform fan-in)."""
    k1, k2, k3, k4 = jax.random.split(key, 4)
    lim1 = 1.0 / jnp.sqrt(in_dim)
    lim2 = 1.0 / jnp.sqrt(hidden_dim)
    w1 = jax.random.uniform(k1, (in_dim, hidden_dim), jnp.float32, -lim1, lim1)
    b1 = jax.random.uniform(k2, (1, hidden_dim), jnp.float32, -lim1, lim1)
    w2 = jax.random.uniform(k3, (hidden_dim, out_dim), jnp.float32, -lim2, lim2)
    b2 = jax.random.uniform(k4, (1, out_dim), jnp.float32, -lim2, lim2)
    return (w1, b1, w2, b2)


def fuse_actor_critic_params(actor_params, critic_params,
                             compute_dtype=jnp.float32):
    """Pack both heads into one lane-padded, block-diagonal parameter set.

    One-time cost at init.  Layout (H_fused = round_up(Ha + Hc, 128)):
      W1f: (D, H_fused)       cols [0:Ha]       = actor W1
                              cols [Ha:Ha+Hc]   = critic W1
      W2f: (H_fused, OUT_PAD) rows [0:Ha],  cols [0:A] = actor W2
                              rows [Ha:Ha+Hc],  col A  = critic W2
    All other entries are zero, so padded hidden lanes are ReLU(0)=0 and
    contribute nothing; actor/critic blocks cannot leak into each other.
    Weights are cast to `compute_dtype` (bf16 on v6e/v7x); biases stay f32.
    """
    aw1, ab1, aw2, ab2 = actor_params
    cw1, cb1, cw2, cb2 = critic_params
    D, Ha = aw1.shape
    _, Hc = cw1.shape
    A = aw2.shape[1]
    assert cw2.shape[1] == 1 and A + 1 <= OUT_PAD

    h_fused = _round_up(max(Ha + Hc, 1), 128)   # single 128-lane tile for 32+32

    w1 = jnp.zeros((D, h_fused), jnp.float32)
    w1 = w1.at[:, :Ha].set(aw1).at[:, Ha:Ha + Hc].set(cw1)

    b1 = jnp.zeros((1, h_fused), jnp.float32)
    b1 = b1.at[:, :Ha].set(ab1).at[:, Ha:Ha + Hc].set(cb1)

    w2 = jnp.zeros((h_fused, OUT_PAD), jnp.float32)
    w2 = w2.at[:Ha, :A].set(aw2).at[Ha:Ha + Hc, A:A + 1].set(cw2)

    b2 = jnp.zeros((1, OUT_PAD), jnp.float32)
    b2 = b2.at[:, :A].set(ab2).at[:, A:A + 1].set(cb2)

    w1 = w1.astype(compute_dtype)
    w2 = w2.astype(compute_dtype)
    return (w1, b1, w2, b2), A


def _choose_batch_tiling(B, align):
    """Tail-friendly batch tiling; >=2 tiles for large B (v7x megacore)."""
    b_aligned = _round_up(B, align)
    if b_aligned <= MIN_SPLIT_B:
        n_tiles = 1
    else:
        n_tiles = max(2, _cdiv(b_aligned, BLOCK_B_MAX))
    block_b = _round_up(_cdiv(b_aligned, n_tiles), align)
    return block_b, n_tiles, block_b * n_tiles


def actor_critic_forward(state, fused_params, action_dim):
    """Equivalent of ActorCritic.forward: returns (action_pred, value_pred)."""
    w1, b1, w2, b2 = fused_params
    compute_dtype = w1.dtype
    state = jnp.asarray(state, dtype=jnp.float32).astype(compute_dtype)
    B, D = state.shape
    h_fused = w1.shape[1]

    # bf16 packs 16 rows per sublane tile; f32 packs 8.
    align = 16 if compute_dtype == jnp.bfloat16 else 8
    block_b, n_tiles, b_pad = _choose_batch_tiling(B, align)
    if b_pad != B:
        state = jnp.pad(state, ((0, b_pad - B), (0, 0)))

    itemsize = jnp.dtype(compute_dtype).itemsize
    cost = pl.CostEstimate(
        flops=2 * b_pad * (D * h_fused + h_fused * OUT_PAD),
        transcendentals=0,
        bytes_accessed=(b_pad * D * itemsize            # state in
                        + b_pad * OUT_PAD * 4           # output slab out
                        + (w1.size + w2.size) * itemsize
                        + (b1.size + b2.size) * 4))

    out = pl.pallas_call(
        _fused_actor_critic_kernel,
        out_shape=jax.ShapeDtypeStruct((b_pad, OUT_PAD), jnp.float32),
        grid_spec=pltpu.PrefetchScalarGridSpec(
            num_scalar_prefetch=0,
            grid=(n_tiles,),
            in_specs=[
                pl.BlockSpec((block_b, D), lambda i: (i, 0)),
                # Constant index_map: weights/biases DMA'd once and stay
                # VMEM-resident across all batch tiles.
                pl.BlockSpec(w1.shape, lambda i: (0, 0)),
                pl.BlockSpec(b1.shape, lambda i: (0, 0)),
                pl.BlockSpec(w2.shape, lambda i: (0, 0)),
                pl.BlockSpec(b2.shape, lambda i: (0, 0)),
            ],
            out_specs=pl.BlockSpec((block_b, OUT_PAD), lambda i: (i, 0)),
        ),
        compiler_params=pltpu.CompilerParams(
            dimension_semantics=("parallel",)),  # shard batch tiles on v7x TCs
        cost_estimate=cost,
    )(state, w1, b1, w2, b2)

    # Layout plumbing in the wrapper: strip padding, split the packed slab.
    # (Consumers that can read the packed (B, 128) slab directly should do so
    # to avoid these extra XLA slice ops.)
    action_pred = out[:B, :action_dim]                   # (B, action_dim)
    value_pred = out[:B, action_dim:action_dim + 1]      # (B, 1)
    return action_pred, value_pred


if __name__ == "__main__":
    # Small shapes consistent with an A2C/PPO setup.
    B, STATE_DIM, HIDDEN, ACTION_DIM = 2, 16, 32, 4

    key = jax.random.PRNGKey(0)
    k_state, k_actor, k_critic = jax.random.split(key, 3)

    state = jax.random.normal(k_state, (B, STATE_DIM), dtype=jnp.float32)
    actor_params = init_mlp_params(k_actor, STATE_DIM, HIDDEN, ACTION_DIM)
    critic_params = init_mlp_params(k_critic, STATE_DIM, HIDDEN, 1)

    # Pure-JAX reference of the ORIGINAL (unfused) per-head math.
    def ref_mlp(x, w1, b1, w2, b2):
        return jnp.maximum(x @ w1 + b1, 0.0) @ w2 + b2

    ref_a = ref_mlp(state, *actor_params)
    ref_v = ref_mlp(state, *critic_params)

    # --- f32 path: exact parity with the original module math. ---
    fused_f32, action_dim = fuse_actor_critic_params(
        actor_params, critic_params, compute_dtype=jnp.float32)
    a32, v32 = actor_critic_forward(state, fused_f32, action_dim)
    jax.block_until_ready((a32, v32))
    assert a32.shape == (B, ACTION_DIM) and v32.shape == (B, 1)
    assert jnp.allclose(a32, ref_a, atol=1e-5, rtol=1e-5)
    assert jnp.allclose(v32, ref_v, atol=1e-5, rtol=1e-5)

    # --- bf16 MXU-input path (v6e/v7x-native); f32 accumulate + epilogue. ---
    fused_bf16, _ = fuse_actor_critic_params(
        actor_params, critic_params, compute_dtype=jnp.bfloat16)
    a16, v16 = actor_critic_forward(state, fused_bf16, action_dim)
    jax.block_until_ready((a16, v16))
    assert jnp.allclose(a16, ref_a, atol=3e-2, rtol=3e-2)
    assert jnp.allclose(v16, ref_v, atol=3e-2, rtol=3e-2)

    # --- Larger batch: exercises tail-friendly tiling and the >=2-tile path. ---
    B2 = 600
    state2 = jax.random.normal(jax.random.PRNGKey(1), (B2, STATE_DIM),
                               dtype=jnp.float32)
    a2, v2 = actor_critic_forward(state2, fused_f32, action_dim)
    jax.block_until_ready((a2, v2))
    assert a2.shape == (B2, ACTION_DIM) and v2.shape == (B2, 1)
    assert jnp.allclose(a2, ref_mlp(state2, *actor_params), atol=1e-4, rtol=1e-4)
    assert jnp.allclose(v2, ref_mlp(state2, *critic_params), atol=1e-4, rtol=1e-4)

    print("KERNEL_OK")
</pallas_src>

<mosaic_0001>
module attributes {stable_mosaic.version = 11 : i64} {
  func.func @_fused_actor_critic_kernel(%arg0: i32, %arg1: memref<8x16xf32, #tpu.memory_space<vmem>>, %arg2: memref<16x128xf32, #tpu.memory_space<vmem>>, %arg3: memref<1x128xf32, #tpu.memory_space<vmem>>, %arg4: memref<128x128xf32, #tpu.memory_space<vmem>>, %arg5: memref<1x128xf32, #tpu.memory_space<vmem>>, %arg6: memref<8x128xf32, #tpu.memory_space<vmem>>) attributes {dimension_semantics = [#tpu.dimension_semantics<parallel>], iteration_bounds = array<i64: 1>, scalar_prefetch = 0 : i64, scratch_operands = 0 : i64, tpu.core_type = #tpu.core_type<tc>, window_params = [{transform_indices = @transform_0, window_bounds = array<i64: 8, 16>}, {pipeline_mode = #tpu.pipeline_mode<synchronous>, transform_indices = @transform_1, window_bounds = array<i64: 16, 128>}, {pipeline_mode = #tpu.pipeline_mode<synchronous>, transform_indices = @transform_2, window_bounds = array<i64: 1, 128>}, {pipeline_mode = #tpu.pipeline_mode<synchronous>, transform_indices = @transform_3, window_bounds = array<i64: 128, 128>}, {pipeline_mode = #tpu.pipeline_mode<synchronous>, transform_indices = @transform_4, window_bounds = array<i64: 1, 128>}, {transform_indices = @transform_5, window_bounds = array<i64: 8, 128>}]} {
    %c0 = arith.constant 0 : index
    %c0_0 = arith.constant 0 : index
    %0 = vector.load %arg1[%c0, %c0_0] : memref<8x16xf32, #tpu.memory_space<vmem>>, vector<8x16xf32>
    %c0_1 = arith.constant 0 : index
    %c0_2 = arith.constant 0 : index
    %1 = vector.load %arg2[%c0_1, %c0_2] : memref<16x128xf32, #tpu.memory_space<vmem>>, vector<16x128xf32>
    %cst = arith.constant dense<0.000000e+00> : vector<8x128xf32>
    %2 = tpu.matmul %0, %1, %cst {dimension_numbers = #tpu.dot_dimension_numbers<[1], [0], [0], [1], [0, 0, 1, 1], [], []>} : vector<8x16xf32>, vector<16x128xf32>, vector<8x128xf32> -> vector<8x128xf32>
    %c0_3 = arith.constant 0 : index
    %c0_4 = arith.constant 0 : index
    %3 = vector.load %arg3[%c0_3, %c0_4] : memref<1x128xf32, #tpu.memory_space<vmem>>, vector<1x128xf32>
    %4 = vector.broadcast %3 : vector<1x128xf32> to vector<8x128xf32>
    %5 = arith.addf %2, %4 : vector<8x128xf32>
    %cst_5 = arith.constant 0.000000e+00 : f32
    %6 = vector.broadcast %cst_5 : f32 to vector<8x128xf32>
    %7 = arith.maximumf %5, %6 : vector<8x128xf32>
    %c0_6 = arith.constant 0 : index
    %c0_7 = arith.constant 0 : index
    %8 = vector.load %arg4[%c0_6, %c0_7] : memref<128x128xf32, #tpu.memory_space<vmem>>, vector<128x128xf32>
    %cst_8 = arith.constant dense<0.000000e+00> : vector<8x128xf32>
    %9 = tpu.matmul %7, %8, %cst_8 {dimension_numbers = #tpu.dot_dimension_numbers<[1], [0], [0], [1], [0, 0, 1, 1], [], []>} : vector<8x128xf32>, vector<128x128xf32>, vector<8x128xf32> -> vector<8x128xf32>
    %c0_9 = arith.constant 0 : index
    %c0_10 = arith.constant 0 : index
    %10 = vector.load %arg5[%c0_9, %c0_10] : memref<1x128xf32, #tpu.memory_space<vmem>>, vector<1x128xf32>
    %11 = vector.broadcast %10 : vector<1x128xf32> to vector<8x128xf32>
    %12 = arith.addf %9, %11 : vector<8x128xf32>
    %c0_11 = arith.constant 0 : index
    %c0_12 = arith.constant 0 : index
    %13 = vector.load %arg6[%c0_11, %c0_12] : memref<8x128xf32, #tpu.memory_space<vmem>>, vector<8x128xf32>
    tpu.vector_store %arg6[%c0_11, %c0_12], %12 {strides = array<i32>} : memref<8x128xf32, #tpu.memory_space<vmem>>, vector<8x128xf32>,
    return
  }
  func.func @transform_0(%arg0: i32) -> (i32, i32) {
    %c0_i32 = arith.constant 0 : i32
    %c0_i32_0 = arith.constant 0 : i32
    return %arg0, %c0_i32 : i32, i32
  }
  func.func @transform_1(%arg0: i32) -> (i32, i32) {
    %c0_i32 = arith.constant 0 : i32
    %c0_i32_0 = arith.constant 0 : i32
    %c0_i32_1 = arith.constant 0 : i32
    return %c0_i32, %c0_i32_0 : i32, i32
  }
  func.func @transform_2(%arg0: i32) -> (i32, i32) {
    %c0_i32 = arith.constant 0 : i32
    %c0_i32_0 = arith.constant 0 : i32
    %c0_i32_1 = arith.constant 0 : i32
    return %c0_i32, %c0_i32_0 : i32, i32
  }
  func.func @transform_3(%arg0: i32) -> (i32, i32) {
    %c0_i32 = arith.constant 0 : i32
    %c0_i32_0 = arith.constant 0 : i32
    %c0_i32_1 = arith.constant 0 : i32
    return %c0_i32, %c0_i32_0 : i32, i32
  }
  func.func @transform_4(%arg0: i32) -> (i32, i32) {
    %c0_i32 = arith.constant 0 : i32
    %c0_i32_0 = arith.constant 0 : i32
    %c0_i32_1 = arith.constant 0 : i32
    return %c0_i32, %c0_i32_0 : i32, i32
  }
  func.func @transform_5(%arg0: i32) -> (i32, i32) {
    %c0_i32 = arith.constant 0 : i32
    %c0_i32_0 = arith.constant 0 : i32
    return %arg0, %c0_i32 : i32, i32
  }
}

</mosaic_0001>

<llo_original>
// kernel: tpu_custom_call.1
$region0: #{tpu_custom_call.1}
  #allocation0 [shape = 'u32[]', space=smem, size = 0x4, offset = 0x4, fixed_abs, tag = 'smem constant byte address 0x4 - core index']
  #allocation1 [shape = 'u32[144,128]{1,0:T(1,128)}', space=vmem, size = 0x12000, scoped, tag = 'internal scratch']
  %s0 = inlined_call_operand.hbm [shape: f32[8,16], index: 0, kind: input, shape index: {}]
  %s1 = inlined_call_operand.hbm [shape: f32[16,128], index: 1, kind: input, shape index: {}]
  %s2 = inlined_call_operand.vmem [shape: f32[1,128], index: 2, kind: input, shape index: {}]
  %s3 = inlined_call_operand.hbm [shape: f32[128,128], index: 3, kind: input, shape index: {}]
  %s4 = inlined_call_operand.vmem [shape: f32[1,128], index: 4, kind: input, shape index: {}]
  %s5 = inlined_call_operand.hbm [shape: f32[8,128], index: 5, kind: output, shape index: {}]
  %s6 = sld [smem:[#allocation0]]
  $region42: #{tpu_custom_call.1} parent=0
    _
  %s8 = ssub.s32 1, %s6
  %s9 = scalar_select 0, %s8, %s6
  $region1: #{tpu_custom_call.1} parent=0
    #allocation2 [shape = 'u8[4096]{0}', space=vmem, size = 0x1000, scoped, tag = 'input window, operand 0, single buffered']
    #allocation3 [shape = 's32[1]{0}', space=sflag, size = 0x4, scoped, tag = 'scoped memory for tpu_custom_call.1']
    #allocation4 [shape = 's32[1]{0}', space=sflag, size = 0x4, scoped, tag = 'scoped memory for tpu_custom_call.1']
    #allocation5 [shape = 'u8[8192]{0}', space=vmem, size = 0x2000, scoped, tag = 'input window, operand 1, single buffered']
    #allocation6 [shape = 's32[1]{0}', space=sflag, size = 0x4, scoped, tag = 'scoped memory for tpu_custom_call.1']
    #allocation7 [shape = 'u8[65536]{0}', space=vmem, size = 0x10000, scoped, tag = 'input window, operand 3, single buffered']
    #allocation8 [shape = 'u8[4096]{0}', space=vmem, size = 0x1000, scoped, tag = 'output window, operand 0, single buffered']
    %10 = vsyncpa [#allocation3], 0
    %11 = vsyncpa [#allocation6], 0
    %12 = vsyncpa [#allocation4], 0
    // Predicated region
    $region2: #{tpu_custom_call.1} parent=1 // pred_check
      _
    $region3: #{tpu_custom_call.1} parent=1 // pred_check_branch
      %14 = sbr.rel (0) target = $region5
    $region4: #{tpu_custom_call.1} parent=1 // pred_region
      %s16 = ssub.s32 128, 128
      %17 = vsyncadd [#allocation3], %s16
      %s19 = sshll.u32 [#allocation2], 4
      %s20 = int_to_ptr.vmem [resolvable:$true] %s19
      %22 = dma.hbm_to_vmem [thread:$0]  %s0, 128, %s20, [#allocation3]
    $region5: #{tpu_custom_call.1} parent=1 // pred_fallthru
      _
    // Predicated region
    $region6: #{tpu_custom_call.1} parent=1 // pred_check
      _
    $region7: #{tpu_custom_call.1} parent=1 // pred_check_branch
      %24 = sbr.rel (0) target = $region9
    $region8: #{tpu_custom_call.1} parent=1 // pred_region
      %s26 = ssub.s32 256, 256
      %27 = vsyncadd [#allocation6], %s26
      %s28 = sshll.u32 [#allocation5], 4
      %s29 = int_to_ptr.vmem [resolvable:$true] %s28
      %34 = dma.hbm_to_vmem [thread:$0]  %s1, 256, %s29, [#allocation6], 128, 128, 8
    $region9: #{tpu_custom_call.1} parent=1 // pred_fallthru
      _
    // Predicated region
    $region10: #{tpu_custom_call.1} parent=1 // pred_check
      _
    $region11: #{tpu_custom_call.1} parent=1 // pred_check_branch
      %36 = sbr.rel (0) target = $region13
    $region12: #{tpu_custom_call.1} parent=1 // pred_region
      _
    $region13: #{tpu_custom_call.1} parent=1 // pred_fallthru
      _
    // Predicated region
    $region14: #{tpu_custom_call.1} parent=1 // pred_check
      _
    $region15: #{tpu_custom_call.1} parent=1 // pred_check_branch
      %38 = sbr.rel (0) target = $region17
    $region16: #{tpu_custom_call.1} parent=1 // pred_region
      %s40 = ssub.s32 2048, 2048
      %41 = vsyncadd [#allocation6], %s40
      %s42 = sshll.u32 [#allocation7], 4
      %s43 = int_to_ptr.vmem [resolvable:$true] %s42
      %48 = dma.hbm_to_vmem [thread:$0]  %s3, 2048, %s43, [#allocation6], 128, 128, 8
    $region17: #{tpu_custom_call.1} parent=1 // pred_fallthru
      _
    // Predicated region
    $region18: #{tpu_custom_call.1} parent=1 // pred_check
      _
    $region19: #{tpu_custom_call.1} parent=1 // pred_check_branch
      %50 = sbr.rel (0) target = $region21
    $region20: #{tpu_custom_call.1} parent=1 // pred_region
      _
    $region21: #{tpu_custom_call.1} parent=1 // pred_fallthru
      _
    // Predicated region
    $region22: #{tpu_custom_call.1} parent=1 // pred_check
      _
    $region23: #{tpu_custom_call.1} parent=1 // pred_check_branch
      %52 = sbr.rel (0) target = $region25
    $region24: #{tpu_custom_call.1} parent=1 // pred_region
      %53 = dma.done [#allocation3], 128
    $region25: #{tpu_custom_call.1} parent=1 // pred_fallthru
      _
    // Predicated region
    $region26: #{tpu_custom_call.1} parent=1 // pred_check
      _
    $region27: #{tpu_custom_call.1} parent=1 // pred_check_branch
      %55 = sbr.rel (0) target = $region29
    $region28: #{tpu_custom_call.1} parent=1 // pred_region
      %56 = dma.done [#allocation6], 256
    $region29: #{tpu_custom_call.1} parent=1 // pred_fallthru
      _
    // Predicated region
    $region30: #{tpu_custom_call.1} parent=1 // pred_check
      _
    $region31: #{tpu_custom_call.1} parent=1 // pred_check_branch
      %58 = sbr.rel (0) target = $region33
    $region32: #{tpu_custom_call.1} parent=1 // pred_region
      %59 = dma.done [#allocation6], 2048
    $region33: #{tpu_custom_call.1} parent=1 // pred_fallthru
      _
    %v60 = vld [vmem:[#allocation2] sm:$0xff]
    %v61 = vld [vmem:[#allocation5] sm:$0xff]
    %v62 = vld [vmem:[#allocation5 + $0x8] sm:$0xff]
    %v63 = vld [vmem:[%s2] sm:$0x1]
    %v65 = vlaneseq
    %v66 = vshrl.u32 %v65, 7
    %v67 = vsub.s32 0, %v66
    %v68 = vrot.slane %v63, %v67
    %vm70 = vcmask 130048
    %v72 = vsel %vm70, %v60, 0
    %74 = vmatprep.subr.mxu0 0.0
    %75 = vmatpush1.msra.mxu0 0.0
    %76 = vmatprep.subr.mxu0 0.0
    %77 = vmatpush1.msra.mxu0 0.0
    %78 = vmatprep.subr.mxu0 0.0
    %79 = vmatpush1.msra.mxu0 0.0
    %80 = vmatprep.subr.mxu0 0.0
    %81 = vmatpush1.msra.mxu0 0.0
    %82 = vmatprep.subr.mxu0 0.0
    %83 = vmatpush1.msra.mxu0 0.0
    %84 = vmatprep.subr.mxu0 0.0
    %85 = vmatpush1.msra.mxu0 0.0
    %86 = vmatprep.subr.mxu0 0.0
    %87 = vmatpush1.msra.mxu0 0.0
    %88 = vmatprep.subr.mxu0 0.0
    %89 = vmatpush1.msra.mxu0 0.0
    %90 = vmatprep.subr.mxu0 0.0
    %91 = vmatpush1.msra.mxu0 0.0
    %92 = vmatprep.subr.mxu0 0.0
    %93 = vmatpush1.msra.mxu0 0.0
    %94 = vmatprep.subr.mxu0 0.0
    %95 = vmatpush1.msra.mxu0 0.0
    %96 = vmatprep.subr.mxu0 0.0
    %97 = vmatpush1.msra.mxu0 0.0
    %98 = vmatprep.subr.mxu0 0.0
    %99 = vmatpush1.msra.mxu0 0.0
    %100 = vmatprep.subr.mxu0 0.0
    %101 = vmatpush1.msra.mxu0 0.0
    %102 = vmatprep.subr.mxu0 0.0
    %103 = vmatpush1.msra.mxu0 %v62
    %104 = vmatprep.subr.mxu0 0.0
    %105 = vmatpush1.msra.mxu0 %v61
    %106 = vmatprep.subr.mxu0 0.0
    %107 = vmatpush2.msra.mxu0 0.0
    %108 = vmatprep.subr.mxu0 0.0
    %109 = vmatpush2.msra.mxu0 0.0
    %110 = vmatprep.subr.mxu0 0.0
    %111 = vmatpush2.msra.mxu0 0.0
    %112 = vmatprep.subr.mxu0 0.0
    %113 = vmatpush2.msra.mxu0 0.0
    %114 = vmatprep.subr.mxu0 0.0
    %115 = vmatpush2.msra.mxu0 0.0
    %116 = vmatprep.subr.mxu0 0.0
    %117 = vmatpush2.msra.mxu0 0.0
    %118 = vmatprep.subr.mxu0 0.0
    %119 = vmatpush2.msra.mxu0 0.0
    %120 = vmatprep.subr.mxu0 0.0
    %121 = vmatpush2.msra.mxu0 0.0
    %122 = vmatprep.subr.mxu0 0.0
    %123 = vmatpush2.msra.mxu0 0.0
    %124 = vmatprep.subr.mxu0 0.0
    %125 = vmatpush2.msra.mxu0 0.0
    %126 = vmatprep.subr.mxu0 0.0
    %127 = vmatpush2.msra.mxu0 0.0
    %128 = vmatprep.subr.mxu0 0.0
    %129 = vmatpush2.msra.mxu0 0.0
    %130 = vmatprep.subr.mxu0 0.0
    %131 = vmatpush2.msra.mxu0 0.0
    %132 = vmatprep.subr.mxu0 0.0
    %133 = vmatpush2.msra.mxu0 0.0
    %134 = vmatprep.subr.mxu0 0.0
    %135 = vmatpush2.msra.mxu0 0.0
    %136 = vmatprep.subr.mxu0 0.0
    %137 = vmatpush2.msra.mxu0 0.0
    %138 = vmatprep.mubr.f32.mxu0 0.0
    %139 = vmatmul.mubr.f32.gmra.mxu0 %v72
    %v140 = vpop.f32.mrf.mxu0
    %v141 = vadd.f32 %v68, %v140
    %v142 = vpop.f32.mrf.mxu0
    %143 = vdwg.mxu0
    %v144 = vmax.f32 %v141, 0.0
    %v145 = vld [vmem:[#allocation7] sm:$0xff]
    %v146 = vld [vmem:[#allocation7 + $0x8] sm:$0xff]
    %v147 = vld [vmem:[#allocation7 + $0x10] sm:$0xff]
    %v148 = vld [vmem:[#allocation7 + $0x18] sm:$0xff]
    %v149 = vld [vmem:[#allocation7 + $0x20] sm:$0xff]
    %v150 = vld [vmem:[#allocation7 + $0x28] sm:$0xff]
    %v151 = vld [vmem:[#allocation7 + $0x30] sm:$0xff]
    %v152 = vld [vmem:[#allocation7 + $0x38] sm:$0xff]
    %v153 = vld [vmem:[#allocation7 + $0x40] sm:$0xff]
    %v154 = vld [vmem:[#allocation7 + $0x48] sm:$0xff]
    %v155 = vld [vmem:[#allocation7 + $0x50] sm:$0xff]
    %v156 = vld [vmem:[#allocation7 + $0x58] sm:$0xff]
    %v157 = vld [vmem:[#allocation7 + $0x60] sm:$0xff]
    %v158 = vld [vmem:[#allocation7 + $0x68] sm:$0xff]
    %v159 = vld [vmem:[#allocation7 + $0x70] sm:$0xff]
    %v160 = vld [vmem:[#allocation7 + $0x78] sm:$0xff]
    %v161 = vld [vmem:[%s4] sm:$0x1]
    %v163 = vlaneseq
    %v164 = vshrl.u32 %v163, 7
    %v165 = vsub.s32 0, %v164
    %v166 = vrot.slane %v161, %v165
    %168 = vmatprep.subr.mxu0 0.0
    %169 = vmatpush1.msra.mxu0 %v160
    %170 = vmatprep.subr.mxu0 0.0
    %171 = vmatpush1.msra.mxu0 %v159
    %172 = vmatprep.subr.mxu0 0.0
    %173 = vmatpush1.msra.mxu0 %v158
    %174 = vmatprep.subr.mxu0 0.0
    %175 = vmatpush1.msra.mxu0 %v157
    %176 = vmatprep.subr.mxu0 0.0
    %177 = vmatpush1.msra.mxu0 %v156
    %178 = vmatprep.subr.mxu0 0.0
    %179 = vmatpush1.msra.mxu0 %v155
    %180 = vmatprep.subr.mxu0 0.0
    %181 = vmatpush1.msra.mxu0 %v154
    %182 = vmatprep.subr.mxu0 0.0
    %183 = vmatpush1.msra.mxu0 %v153
    %184 = vmatprep.subr.mxu0 0.0
    %185 = vmatpush1.msra.mxu0 %v152
    %186 = vmatprep.subr.mxu0 0.0
    %187 = vmatpush1.msra.mxu0 %v151
    %188 = vmatprep.subr.mxu0 0.0
    %189 = vmatpush1.msra.mxu0 %v150
    %190 = vmatprep.subr.mxu0 0.0
    %191 = vmatpush1.msra.mxu0 %v149
    %192 = vmatprep.subr.mxu0 0.0
    %193 = vmatpush1.msra.mxu0 %v148
    %194 = vmatprep.subr.mxu0 0.0
    %195 = vmatpush1.msra.mxu0 %v147
    %196 = vmatprep.subr.mxu0 0.0
    %197 = vmatpush1.msra.mxu0 %v146
    %198 = vmatprep.subr.mxu0 0.0
    %199 = vmatpush1.msra.mxu0 %v145
    %200 = vmatprep.subr.mxu0 0.0
    %201 = vmatpush2.msra.mxu0 0.0
    %202 = vmatprep.subr.mxu0 0.0
    %203 = vmatpush2.msra.mxu0 0.0
    %204 = vmatprep.subr.mxu0 0.0
    %205 = vmatpush2.msra.mxu0 0.0
    %206 = vmatprep.subr.mxu0 0.0
    %207 = vmatpush2.msra.mxu0 0.0
    %208 = vmatprep.subr.mxu0 0.0
    %209 = vmatpush2.msra.mxu0 0.0
    %210 = vmatprep.subr.mxu0 0.0
    %211 = vmatpush2.msra.mxu0 0.0
    %212 = vmatprep.subr.mxu0 0.0
    %213 = vmatpush2.msra.mxu0 0.0
    %214 = vmatprep.subr.mxu0 0.0
    %215 = vmatpush2.msra.mxu0 0.0
    %216 = vmatprep.subr.mxu0 0.0
    %217 = vmatpush2.msra.mxu0 0.0
    %218 = vmatprep.subr.mxu0 0.0
    %219 = vmatpush2.msra.mxu0 0.0
    %220 = vmatprep.subr.mxu0 0.0
    %221 = vmatpush2.msra.mxu0 0.0
    %222 = vmatprep.subr.mxu0 0.0
    %223 = vmatpush2.msra.mxu0 0.0
    %224 = vmatprep.subr.mxu0 0.0
    %225 = vmatpush2.msra.mxu0 0.0
    %226 = vmatprep.subr.mxu0 0.0
    %227 = vmatpush2.msra.mxu0 0.0
    %228 = vmatprep.subr.mxu0 0.0
    %229 = vmatpush2.msra.mxu0 0.0
    %230 = vmatprep.subr.mxu0 0.0
    %231 = vmatpush2.msra.mxu0 0.0
    %232 = vmatprep.mubr.f32.mxu0 0.0
    %233 = vmatmul.mubr.f32.gmra.mxu0 %v144
    %v234 = vpop.f32.mrf.mxu0
    %v235 = vadd.f32 %v166, %v234
    %v236 = vpop.f32.mrf.mxu0
    %237 = vdwg.mxu0
    %238 = vst [vmem:[#allocation8] sm:$0xff] %v235
    // Predicated region
    $region34: #{tpu_custom_call.1} parent=1 // pred_check
      _
    $region35: #{tpu_custom_call.1} parent=1 // pred_check_branch
      %240 = sbr.rel (0) target = $region37
    $region36: #{tpu_custom_call.1} parent=1 // pred_region
      %s242 = ssub.s32 128, 128
      %243 = vsyncadd [#allocation4], %s242
      %s245 = sshll.u32 [#allocation8], 4
      %s246 = int_to_ptr.vmem [resolvable:$true] %s245
      %248 = dma.vmem_to_hbm [thread:$0]  %s246, 128, %s5, [#allocation4]
    $region37: #{tpu_custom_call.1} parent=1 // pred_fallthru
      _
    // Predicated region
    $region38: #{tpu_custom_call.1} parent=1 // pred_check
      _
    $region39: #{tpu_custom_call.1} parent=1 // pred_check_branch
      %250 = sbr.rel (0) target = $region41
    $region40: #{tpu_custom_call.1} parent=1 // pred_region
      %251 = dma.done [#allocation4], 128
    $region41: #{tpu_custom_call.1} parent=1 // pred_fallthru
      _
    %252 = vsyncpa [#allocation3], 1
    %253 = vsyncpa [#allocation6], 1
    %254 = vsyncpa [#allocation4], 1

</llo_original>
